<compile_context>
chip_gen: v7x
topology: tpu7x:2x2x1
jax: 0.10.0
libtpu: 0.0.40
codegen_flags: <defaults>
</compile_context>

<pallas_src>
import jax
import jax.numpy as jnp
from jax.experimental import pallas as pl
from jax.experimental.pallas import tpu as pltpu  # noqa: F401 (kept for parity / future tuning)

# ----------------------------------------------------------------------------
# Small shapes consistent with the module
# ----------------------------------------------------------------------------
B = 2
T = 16            # sequence length
DIM = 8           # channels (dim)
INTER = 32        # intermediate_dim
KSIZE = 7
PAD = KSIZE // 2  # 3
PW = T + 2 * PAD  # 22: per-batch zero-padded width
CW = PW + T       # 38: valid conv-output width on the combined strip

_GELU_C = 0.7978845608028654      # sqrt(2/pi), tanh-GELU constant
_INV_SQRT2 = 0.7071067811865476   # used only by the erf reference


# ----------------------------------------------------------------------------
# Fused kernel: dwconv(k=7) -> LayerNorm -> pwconv1 -> GELU -> GRN -> pwconv2
#               -> + residual.   One lane-dense (., B*T) slab after the dwconv.
# ----------------------------------------------------------------------------
def convnext_block_kernel(x_ref, p_ref, w1_ref, w2_ref, out_ref):
    # ---- unpack the single packed parameter slab (static slices) ----
    b1 = p_ref[:, 0:1]                   # (INTER, 1)
    grn_g = p_ref[:, 1:2]                # (INTER, 1)
    grn_b = p_ref[:, 2:3]                # (INTER, 1)
    dw = p_ref[0:DIM, 3:3 + KSIZE]       # (DIM, KSIZE)
    dwb = p_ref[0:DIM, 10:11]            # (DIM, 1)
    ln_g = p_ref[0:DIM, 11:12]           # (DIM, 1)
    ln_b = p_ref[0:DIM, 12:13]           # (DIM, 1)
    b2 = p_ref[0:DIM, 13:14]             # (DIM, 1)
    w1 = w1_ref[...]                     # (INTER, DIM)  bf16 (pre-cast host-side)
    w2 = w2_ref[...]                     # (DIM, INTER)  bf16

    x0 = x_ref[0]                        # (DIM, T) f32
    x1 = x_ref[1]                        # (DIM, T) f32

    # ---- depthwise conv1d (k=7, pad=3) on one combined zero-padded strip ----
    # Strip layout: [pad | x0 | pad || pad | x1 | pad]  (DIM, 2*PW) = (8, 44).
    zpad = jnp.zeros((DIM, PAD), jnp.float32)
    xp = jnp.concatenate([zpad, x0, zpad, zpad, x1, zpad], axis=1)

    # Hoisted weight-column broadcasts: each emitted exactly once.
    dw_cols = [jnp.broadcast_to(dw[:, k:k + 1], (DIM, CW)) for k in range(KSIZE)]
    acc = jnp.broadcast_to(dwb, (DIM, CW))
    for k in range(KSIZE):               # 7 shifted FMAs for BOTH batches
        acc = acc + xp[:, k:k + CW] * dw_cols[k]
    # Keep only the valid per-batch windows -> lane-dense (DIM, B*T) slab.
    y = jnp.concatenate([acc[:, 0:T], acc[:, PW:PW + T]], axis=1)    # (DIM, 32)

    # ---- LayerNorm over channels (sublane axis), eps = 1e-6 ----
    mu = jnp.mean(y, axis=0, keepdims=True)                          # (1, 32)
    var = jnp.mean((y - mu) ** 2, axis=0, keepdims=True)
    yn = ln_g * ((y - mu) * jax.lax.rsqrt(var + 1e-6)) + ln_b        # (DIM, 32)

    # ---- pwconv1: one MXU dot for both batches (bf16 in / f32 acc) ----
    h = jnp.dot(w1, yn.astype(jnp.bfloat16),
                preferred_element_type=jnp.float32) + b1             # (INTER, 32)
    # tanh-approx GELU on the EUP.
    # TODO(synk): torch nn.GELU() defaults to exact erf; this matches
    # nn.GELU(approximate='tanh') to ~3e-3 absolute.
    h = 0.5 * h * (1.0 + jnp.tanh(_GELU_C * (h + 0.044715 * h * h * h)))

    # ---- GRN: per-batch L2 norm over time (lanes), mean over channels ----
    h0 = h[:, 0:T]
    h1 = h[:, T:B * T]
    gx0 = jnp.sqrt(jnp.sum(h0 * h0, axis=1, keepdims=True))          # (INTER, 1)
    gx1 = jnp.sqrt(jnp.sum(h1 * h1, axis=1, keepdims=True))
    nx0 = gx0 * pl.reciprocal(jnp.mean(gx0, axis=0, keepdims=True) + 1e-6,
                              approx=True)                           # (INTER, 1)
    nx1 = gx1 * pl.reciprocal(jnp.mean(gx1, axis=0, keepdims=True) + 1e-6,
                              approx=True)
    lane = jax.lax.broadcasted_iota(jnp.int32, (INTER, B * T), 1)
    nx = jnp.where(lane < T, nx0, nx1)                               # (INTER, 32)
    g = grn_g * (h * nx) + grn_b + h

    # ---- pwconv2: one MXU dot, then residual ----
    y2 = jnp.dot(w2, g.astype(jnp.bfloat16),
                 preferred_element_type=jnp.float32) + b2            # (DIM, 32)
    out_ref[0] = x0 + y2[:, 0:T]
    out_ref[1] = x1 + y2[:, T:B * T]


# ----------------------------------------------------------------------------
# Wrapper — single-shot pallas_call, no grid / no pipeline scaffolding.
# ----------------------------------------------------------------------------
def convnext_block(x_nct, params):
    """x_nct: (B, DIM, T) NCW like PyTorch; returns (B, DIM, T) float32."""
    # 4 input DMAs total: x, packed params, w1(bf16), w2(bf16).  At these
    # shapes the body is shorter than per-grid-step overhead, so we keep a
    # single invocation; a grid=(B,) "parallel" split is the knob to use the
    # second TensorCore on v7x only if this block is scaled up.
    return pl.pallas_call(
        convnext_block_kernel,
        out_shape=jax.ShapeDtypeStruct((B, DIM, T), jnp.float32),
    )(
        x_nct.astype(jnp.float32),
        params["packed"],
        params["w1_bf16"],
        params["w2_bf16"],
    )


# ----------------------------------------------------------------------------
# Deterministic parameter construction (+ packed slab / bf16 weights)
# ----------------------------------------------------------------------------
def make_params(key):
    ks = jax.random.split(key, 10)
    n = jax.random.normal
    dw_w = 0.1 * n(ks[0], (DIM, KSIZE), jnp.float32)        # Conv1d weight[:, 0, :]
    dw_b = 0.1 * n(ks[1], (DIM,), jnp.float32)
    ln_g = 1.0 + 0.05 * n(ks[2], (DIM,), jnp.float32)
    ln_b = 0.05 * n(ks[3], (DIM,), jnp.float32)
    w1 = 0.1 * n(ks[4], (INTER, DIM), jnp.float32)          # torch Linear (out, in)
    b1 = 0.1 * n(ks[5], (INTER,), jnp.float32)
    # torch inits GRN gamma/beta to zeros (identity path); small random values
    # are used here so the GRN math is actually exercised by the check.
    grn_g = 0.1 * n(ks[6], (INTER,), jnp.float32)
    grn_b = 0.1 * n(ks[7], (INTER,), jnp.float32)
    w2 = 0.1 * n(ks[8], (DIM, INTER), jnp.float32)
    b2 = 0.1 * n(ks[9], (DIM,), jnp.float32)

    # One packed f32 slab -> a single small-parameter DMA at kernel entry.
    packed = jnp.zeros((INTER, 16), jnp.float32)
    packed = packed.at[:, 0].set(b1)
    packed = packed.at[:, 1].set(grn_g)
    packed = packed.at[:, 2].set(grn_b)
    packed = packed.at[0:DIM, 3:3 + KSIZE].set(dw_w)
    packed = packed.at[0:DIM, 10].set(dw_b)
    packed = packed.at[0:DIM, 11].set(ln_g)
    packed = packed.at[0:DIM, 12].set(ln_b)
    packed = packed.at[0:DIM, 13].set(b2)

    return dict(
        dw_w=dw_w, dw_b=dw_b, ln_g=ln_g, ln_b=ln_b, w1=w1, b1=b1,
        grn_g=grn_g, grn_b=grn_b, w2=w2, b2=b2,
        packed=packed,
        w1_bf16=w1.astype(jnp.bfloat16),
        w2_bf16=w2.astype(jnp.bfloat16),
    )


# ----------------------------------------------------------------------------
# Pure-JAX reference (f32, exact-erf GELU, mirrors the PyTorch module)
# ----------------------------------------------------------------------------
def ref_block(x, p):
    xp = jnp.pad(x, ((0, 0), (0, 0), (PAD, PAD)))
    y = sum(xp[:, :, k:k + T] * p["dw_w"][None, :, k:k + 1] for k in range(KSIZE))
    y = y + p["dw_b"][None, :, None]                         # (B, DIM, T)
    yt = jnp.transpose(y, (0, 2, 1))                         # (B, T, DIM)
    mu = jnp.mean(yt, axis=-1, keepdims=True)
    var = jnp.mean((yt - mu) ** 2, axis=-1, keepdims=True)
    h0 = (yt - mu) / jnp.sqrt(var + 1e-6) * p["ln_g"] + p["ln_b"]
    h = h0 @ p["w1"].T + p["b1"]                             # (B, T, INTER)
    h = 0.5 * h * (1.0 + jax.lax.erf(h * _INV_SQRT2))        # exact GELU (torch default)
    gx = jnp.sqrt(jnp.sum(h * h, axis=1, keepdims=True))     # (B, 1, INTER)
    nx = gx / (jnp.mean(gx, axis=-1, keepdims=True) + 1e-6)
    g = p["grn_g"] * (h * nx) + p["grn_b"] + h
    y2 = g @ p["w2"].T + p["b2"]                             # (B, T, DIM)
    return x + jnp.transpose(y2, (0, 2, 1))


# ----------------------------------------------------------------------------
if __name__ == "__main__":
    key = jax.random.PRNGKey(0)
    kx, kp = jax.random.split(key)

    x = jax.random.normal(kx, (B, DIM, T), dtype=jnp.float32)   # NCW, like torch
    params = make_params(kp)

    out = jax.block_until_ready(convnext_block(x, params))
    assert out.shape == (B, DIM, T), out.shape

    ref = jax.block_until_ready(ref_block(x, params))
    # Tolerance absorbs tanh-GELU vs erf, bf16 MXU inputs, approx reciprocal.
    if not bool(jnp.allclose(out, ref, atol=2e-2, rtol=2e-2)):
        err = float(jnp.max(jnp.abs(out - ref)))
        raise AssertionError(f"Pallas kernel disagrees with reference (max abs err {err})")

    print("KERNEL_OK")
</pallas_src>

<mosaic_0001>
module attributes {stable_mosaic.version = 11 : i64} {
  func.func @convnext_block_kernel(%arg0: memref<2x8x16xf32, #tpu.memory_space<vmem>>, %arg1: memref<32x16xf32, #tpu.memory_space<vmem>>, %arg2: memref<32x8xbf16, #tpu.memory_space<vmem>>, %arg3: memref<8x32xbf16, #tpu.memory_space<vmem>>, %arg4: memref<2x8x16xf32, #tpu.memory_space<vmem>>) attributes {dimension_semantics = [], scalar_prefetch = 0 : i64, scratch_operands = 0 : i64, tpu.core_type = #tpu.core_type<tc>} {
    %c0 = arith.constant 0 : index
    %c0_0 = arith.constant 0 : index
    %0 = vector.load %arg1[%c0, %c0_0] : memref<32x16xf32, #tpu.memory_space<vmem>>, vector<32x1xf32>
    %c0_1 = arith.constant 0 : index
    %c1 = arith.constant 1 : index
    %1 = vector.load %arg1[%c0_1, %c1] : memref<32x16xf32, #tpu.memory_space<vmem>>, vector<32x1xf32>
    %c0_2 = arith.constant 0 : index
    %c2 = arith.constant 2 : index
    %2 = vector.load %arg1[%c0_2, %c2] : memref<32x16xf32, #tpu.memory_space<vmem>>, vector<32x1xf32>
    %c0_3 = arith.constant 0 : index
    %c3 = arith.constant 3 : index
    %3 = vector.load %arg1[%c0_3, %c3] : memref<32x16xf32, #tpu.memory_space<vmem>>, vector<8x7xf32>
    %c0_4 = arith.constant 0 : index
    %c10 = arith.constant 10 : index
    %4 = vector.load %arg1[%c0_4, %c10] : memref<32x16xf32, #tpu.memory_space<vmem>>, vector<8x1xf32>
    %c0_5 = arith.constant 0 : index
    %c11 = arith.constant 11 : index
    %5 = vector.load %arg1[%c0_5, %c11] : memref<32x16xf32, #tpu.memory_space<vmem>>, vector<8x1xf32>
    %c0_6 = arith.constant 0 : index
    %c12 = arith.constant 12 : index
    %6 = vector.load %arg1[%c0_6, %c12] : memref<32x16xf32, #tpu.memory_space<vmem>>, vector<8x1xf32>
    %c0_7 = arith.constant 0 : index
    %c13 = arith.constant 13 : index
    %7 = vector.load %arg1[%c0_7, %c13] : memref<32x16xf32, #tpu.memory_space<vmem>>, vector<8x1xf32>
    %c0_8 = arith.constant 0 : index
    %c0_9 = arith.constant 0 : index
    %8 = vector.load %arg2[%c0_8, %c0_9] : memref<32x8xbf16, #tpu.memory_space<vmem>>, vector<32x8xbf16>
    %c0_10 = arith.constant 0 : index
    %c0_11 = arith.constant 0 : index
    %9 = vector.load %arg3[%c0_10, %c0_11] : memref<8x32xbf16, #tpu.memory_space<vmem>>, vector<8x32xbf16>
    %c0_12 = arith.constant 0 : index
    %c0_13 = arith.constant 0 : index
    %c0_14 = arith.constant 0 : index
    %10 = vector.load %arg0[%c0_12, %c0_13, %c0_14] : memref<2x8x16xf32, #tpu.memory_space<vmem>>, vector<1x8x16xf32>
    %11 = vector.shape_cast %10 : vector<1x8x16xf32> to vector<8x16xf32>
    %c1_15 = arith.constant 1 : index
    %c0_16 = arith.constant 0 : index
    %c0_17 = arith.constant 0 : index
    %12 = vector.load %arg0[%c1_15, %c0_16, %c0_17] : memref<2x8x16xf32, #tpu.memory_space<vmem>>, vector<1x8x16xf32>
    %13 = vector.shape_cast %12 : vector<1x8x16xf32> to vector<8x16xf32>
    %cst = arith.constant 0.000000e+00 : f32
    %14 = vector.broadcast %cst : f32 to vector<8x3xf32>
    %15 = tpu.concatenate %14, %11, %14, %14, %13, %14 in 1 : vector<8x3xf32>, vector<8x16xf32>, vector<8x3xf32>, vector<8x3xf32>, vector<8x16xf32>, vector<8x3xf32> -> vector<8x44xf32>
    %16 = vector.extract_strided_slice %3 {offsets = [0, 0], sizes = [8, 1], strides = [1, 1]} : vector<8x7xf32> to vector<8x1xf32>
    %17 = vector.shape_cast %16 : vector<8x1xf32> to vector<8x1xf32>
    %18 = vector.broadcast %17 : vector<8x1xf32> to vector<8x38xf32>
    %19 = vector.extract_strided_slice %3 {offsets = [0, 1], sizes = [8, 1], strides = [1, 1]} : vector<8x7xf32> to vector<8x1xf32>
    %20 = vector.shape_cast %19 : vector<8x1xf32> to vector<8x1xf32>
    %21 = vector.broadcast %20 : vector<8x1xf32> to vector<8x38xf32>
    %22 = vector.extract_strided_slice %3 {offsets = [0, 2], sizes = [8, 1], strides = [1, 1]} : vector<8x7xf32> to vector<8x1xf32>
    %23 = vector.shape_cast %22 : vector<8x1xf32> to vector<8x1xf32>
    %24 = vector.broadcast %23 : vector<8x1xf32> to vector<8x38xf32>
    %25 = vector.extract_strided_slice %3 {offsets = [0, 3], sizes = [8, 1], strides = [1, 1]} : vector<8x7xf32> to vector<8x1xf32>
    %26 = vector.shape_cast %25 : vector<8x1xf32> to vector<8x1xf32>
    %27 = vector.broadcast %26 : vector<8x1xf32> to vector<8x38xf32>
    %28 = vector.extract_strided_slice %3 {offsets = [0, 4], sizes = [8, 1], strides = [1, 1]} : vector<8x7xf32> to vector<8x1xf32>
    %29 = vector.shape_cast %28 : vector<8x1xf32> to vector<8x1xf32>
    %30 = vector.broadcast %29 : vector<8x1xf32> to vector<8x38xf32>
    %31 = vector.extract_strided_slice %3 {offsets = [0, 5], sizes = [8, 1], strides = [1, 1]} : vector<8x7xf32> to vector<8x1xf32>
    %32 = vector.shape_cast %31 : vector<8x1xf32> to vector<8x1xf32>
    %33 = vector.broadcast %32 : vector<8x1xf32> to vector<8x38xf32>
    %34 = vector.extract_strided_slice %3 {offsets = [0, 6], sizes = [8, 1], strides = [1, 1]} : vector<8x7xf32> to vector<8x1xf32>
    %35 = vector.shape_cast %34 : vector<8x1xf32> to vector<8x1xf32>
    %36 = vector.broadcast %35 : vector<8x1xf32> to vector<8x38xf32>
    %37 = vector.shape_cast %4 : vector<8x1xf32> to vector<8x1xf32>
    %38 = vector.broadcast %37 : vector<8x1xf32> to vector<8x38xf32>
    %39 = vector.extract_strided_slice %15 {offsets = [0, 0], sizes = [8, 38], strides = [1, 1]} : vector<8x44xf32> to vector<8x38xf32>
    %40 = arith.mulf %39, %18 : vector<8x38xf32>
    %41 = arith.addf %38, %40 : vector<8x38xf32>
    %42 = vector.extract_strided_slice %15 {offsets = [0, 1], sizes = [8, 38], strides = [1, 1]} : vector<8x44xf32> to vector<8x38xf32>
    %43 = arith.mulf %42, %21 : vector<8x38xf32>
    %44 = arith.addf %41, %43 : vector<8x38xf32>
    %45 = vector.extract_strided_slice %15 {offsets = [0, 2], sizes = [8, 38], strides = [1, 1]} : vector<8x44xf32> to vector<8x38xf32>
    %46 = arith.mulf %45, %24 : vector<8x38xf32>
    %47 = arith.addf %44, %46 : vector<8x38xf32>
    %48 = vector.extract_strided_slice %15 {offsets = [0, 3], sizes = [8, 38], strides = [1, 1]} : vector<8x44xf32> to vector<8x38xf32>
    %49 = arith.mulf %48, %27 : vector<8x38xf32>
    %50 = arith.addf %47, %49 : vector<8x38xf32>
    %51 = vector.extract_strided_slice %15 {offsets = [0, 4], sizes = [8, 38], strides = [1, 1]} : vector<8x44xf32> to vector<8x38xf32>
    %52 = arith.mulf %51, %30 : vector<8x38xf32>
    %53 = arith.addf %50, %52 : vector<8x38xf32>
    %54 = vector.extract_strided_slice %15 {offsets = [0, 5], sizes = [8, 38], strides = [1, 1]} : vector<8x44xf32> to vector<8x38xf32>
    %55 = arith.mulf %54, %33 : vector<8x38xf32>
    %56 = arith.addf %53, %55 : vector<8x38xf32>
    %57 = vector.extract_strided_slice %15 {offsets = [0, 6], sizes = [8, 38], strides = [1, 1]} : vector<8x44xf32> to vector<8x38xf32>
    %58 = arith.mulf %57, %36 : vector<8x38xf32>
    %59 = arith.addf %56, %58 : vector<8x38xf32>
    %60 = vector.extract_strided_slice %59 {offsets = [0, 0], sizes = [8, 16], strides = [1, 1]} : vector<8x38xf32> to vector<8x16xf32>
    %61 = vector.extract_strided_slice %59 {offsets = [0, 22], sizes = [8, 16], strides = [1, 1]} : vector<8x38xf32> to vector<8x16xf32>
    %62 = tpu.concatenate %60, %61 in 1 : vector<8x16xf32>, vector<8x16xf32> -> vector<8x32xf32>
    %cst_18 = arith.constant dense<0.000000e+00> : vector<32xf32>
    %63 = vector.multi_reduction <add>, %62, %cst_18 [0] : vector<8x32xf32> to vector<32xf32>
    %64 = vector.shape_cast %63 : vector<32xf32> to vector<1x32xf32>
    %cst_19 = arith.constant 8.000000e+00 : f32
    %65 = vector.broadcast %cst_19 : f32 to vector<1x32xf32>
    %66 = arith.divf %64, %65 : vector<1x32xf32>
    %67 = vector.broadcast %66 : vector<1x32xf32> to vector<8x32xf32>
    %68 = arith.subf %62, %67 : vector<8x32xf32>
    %69 = arith.mulf %68, %68 : vector<8x32xf32>
    %cst_20 = arith.constant dense<0.000000e+00> : vector<32xf32>
    %70 = vector.multi_reduction <add>, %69, %cst_20 [0] : vector<8x32xf32> to vector<32xf32>
    %71 = vector.shape_cast %70 : vector<32xf32> to vector<1x32xf32>
    %cst_21 = arith.constant 8.000000e+00 : f32
    %72 = vector.broadcast %cst_21 : f32 to vector<1x32xf32>
    %73 = arith.divf %71, %72 : vector<1x32xf32>
    %74 = vector.broadcast %66 : vector<1x32xf32> to vector<8x32xf32>
    %75 = arith.subf %62, %74 : vector<8x32xf32>
    %cst_22 = arith.constant 9.99999997E-7 : f32
    %76 = vector.broadcast %cst_22 : f32 to vector<1x32xf32>
    %77 = arith.addf %73, %76 : vector<1x32xf32>
    %78 = math.rsqrt %77 : vector<1x32xf32>
    %79 = vector.broadcast %78 : vector<1x32xf32> to vector<8x32xf32>
    %80 = arith.mulf %75, %79 : vector<8x32xf32>
    %81 = vector.broadcast %5 : vector<8x1xf32> to vector<8x32xf32>
    %82 = arith.mulf %81, %80 : vector<8x32xf32>
    %83 = vector.broadcast %6 : vector<8x1xf32> to vector<8x32xf32>
    %84 = arith.addf %82, %83 : vector<8x32xf32>
    %85 = arith.truncf %84 : vector<8x32xf32> to vector<8x32xbf16>
    %cst_23 = arith.constant dense<0.000000e+00> : vector<32x32xf32>
    %86 = tpu.matmul %8, %85, %cst_23 {dimension_numbers = #tpu.dot_dimension_numbers<[1], [0], [0], [1], [0, 0, 1, 1], [], []>} : vector<32x8xbf16>, vector<8x32xbf16>, vector<32x32xf32> -> vector<32x32xf32>
    %87 = vector.broadcast %0 : vector<32x1xf32> to vector<32x32xf32>
    %88 = arith.addf %86, %87 : vector<32x32xf32>
    %cst_24 = arith.constant 5.000000e-01 : f32
    %89 = vector.broadcast %cst_24 : f32 to vector<32x32xf32>
    %90 = arith.mulf %89, %88 : vector<32x32xf32>
    %cst_25 = arith.constant 4.471500e-02 : f32
    %91 = vector.broadcast %cst_25 : f32 to vector<32x32xf32>
    %92 = arith.mulf %91, %88 : vector<32x32xf32>
    %93 = arith.mulf %92, %88 : vector<32x32xf32>
    %94 = arith.mulf %93, %88 : vector<32x32xf32>
    %95 = arith.addf %88, %94 : vector<32x32xf32>
    %cst_26 = arith.constant 0.797884583 : f32
    %96 = vector.broadcast %cst_26 : f32 to vector<32x32xf32>
    %97 = arith.mulf %96, %95 : vector<32x32xf32>
    %98 = math.tanh %97 : vector<32x32xf32>
    %cst_27 = arith.constant 1.000000e+00 : f32
    %99 = vector.broadcast %cst_27 : f32 to vector<32x32xf32>
    %100 = arith.addf %99, %98 : vector<32x32xf32>
    %101 = arith.mulf %90, %100 : vector<32x32xf32>
    %102 = vector.extract_strided_slice %101 {offsets = [0, 0], sizes = [32, 16], strides = [1, 1]} : vector<32x32xf32> to vector<32x16xf32>
    %103 = vector.extract_strided_slice %101 {offsets = [0, 16], sizes = [32, 16], strides = [1, 1]} : vector<32x32xf32> to vector<32x16xf32>
    %104 = arith.mulf %102, %102 : vector<32x16xf32>
    %cst_28 = arith.constant dense<0.000000e+00> : vector<32xf32>
    %105 = vector.multi_reduction <add>, %104, %cst_28 [1] : vector<32x16xf32> to vector<32xf32>
    %106 = vector.shape_cast %105 : vector<32xf32> to vector<32x1xf32>
    %107 = math.sqrt %106 : vector<32x1xf32>
    %108 = arith.mulf %103, %103 : vector<32x16xf32>
    %cst_29 = arith.constant dense<0.000000e+00> : vector<32xf32>
    %109 = vector.multi_reduction <add>, %108, %cst_29 [1] : vector<32x16xf32> to vector<32xf32>
    %110 = vector.shape_cast %109 : vector<32xf32> to vector<32x1xf32>
    %111 = math.sqrt %110 : vector<32x1xf32>
    %cst_30 = arith.constant dense<0.000000e+00> : vector<1xf32>
    %112 = vector.multi_reduction <add>, %107, %cst_30 [0] : vector<32x1xf32> to vector<1xf32>
    %113 = vector.shape_cast %112 : vector<1xf32> to vector<1x1xf32>
    %cst_31 = arith.constant 3.200000e+01 : f32
    %114 = vector.broadcast %cst_31 : f32 to vector<1x1xf32>
    %115 = arith.divf %113, %114 : vector<1x1xf32>
    %cst_32 = arith.constant 9.99999997E-7 : f32
    %116 = vector.broadcast %cst_32 : f32 to vector<1x1xf32>
    %117 = arith.addf %115, %116 : vector<1x1xf32>
    %118 = tpu.reciprocal %117 {approx = true} : vector<1x1xf32> -> vector<1x1xf32>
    %119 = vector.broadcast %118 : vector<1x1xf32> to vector<32x1xf32>
    %120 = arith.mulf %107, %119 : vector<32x1xf32>
    %cst_33 = arith.constant dense<0.000000e+00> : vector<1xf32>
    %121 = vector.multi_reduction <add>, %111, %cst_33 [0] : vector<32x1xf32> to vector<1xf32>
    %122 = vector.shape_cast %121 : vector<1xf32> to vector<1x1xf32>
    %cst_34 = arith.constant 3.200000e+01 : f32
    %123 = vector.broadcast %cst_34 : f32 to vector<1x1xf32>
    %124 = arith.divf %122, %123 : vector<1x1xf32>
    %cst_35 = arith.constant 9.99999997E-7 : f32
    %125 = vector.broadcast %cst_35 : f32 to vector<1x1xf32>
    %126 = arith.addf %124, %125 : vector<1x1xf32>
    %127 = tpu.reciprocal %126 {approx = true} : vector<1x1xf32> -> vector<1x1xf32>
    %128 = vector.broadcast %127 : vector<1x1xf32> to vector<32x1xf32>
    %129 = arith.mulf %111, %128 : vector<32x1xf32>
    %130 = tpu.iota {dimensions = array<i32: 1>} : vector<32x32xi32>
    %c16_i32 = arith.constant 16 : i32
    %131 = vector.broadcast %c16_i32 : i32 to vector<32x32xi32>
    %132 = arith.cmpi slt, %130, %131 : vector<32x32xi32>
    %133 = vector.shape_cast %120 : vector<32x1xf32> to vector<32x1xf32>
    %134 = vector.broadcast %133 : vector<32x1xf32> to vector<32x32xf32>
    %135 = vector.shape_cast %129 : vector<32x1xf32> to vector<32x1xf32>
    %136 = vector.broadcast %135 : vector<32x1xf32> to vector<32x32xf32>
    %137 = arith.select %132, %134, %136 : vector<32x32xi1>, vector<32x32xf32>
    %138 = arith.mulf %101, %137 : vector<32x32xf32>
    %139 = vector.broadcast %1 : vector<32x1xf32> to vector<32x32xf32>
    %140 = arith.mulf %139, %138 : vector<32x32xf32>
    %141 = vector.broadcast %2 : vector<32x1xf32> to vector<32x32xf32>
    %142 = arith.addf %140, %141 : vector<32x32xf32>
    %143 = arith.addf %142, %101 : vector<32x32xf32>
    %144 = arith.truncf %143 : vector<32x32xf32> to vector<32x32xbf16>
    %cst_36 = arith.constant dense<0.000000e+00> : vector<8x32xf32>
    %145 = tpu.matmul %9, %144, %cst_36 {dimension_numbers = #tpu.dot_dimension_numbers<[1], [0], [0], [1], [0, 0, 1, 1], [], []>} : vector<8x32xbf16>, vector<32x32xbf16>, vector<8x32xf32> -> vector<8x32xf32>
    %146 = vector.broadcast %7 : vector<8x1xf32> to vector<8x32xf32>
    %147 = arith.addf %145, %146 : vector<8x32xf32>
    %148 = vector.extract_strided_slice %147 {offsets = [0, 0], sizes = [8, 16], strides = [1, 1]} : vector<8x32xf32> to vector<8x16xf32>
    %149 = arith.addf %11, %148 : vector<8x16xf32>
    %c0_37 = arith.constant 0 : index
    %c0_38 = arith.constant 0 : index
    %c0_39 = arith.constant 0 : index
    %150 = vector.load %arg4[%c0_37, %c0_38, %c0_39] : memref<2x8x16xf32, #tpu.memory_space<vmem>>, vector<1x8x16xf32>
    %151 = vector.shape_cast %150 : vector<1x8x16xf32> to vector<8x16xf32>
    %152 = vector.shape_cast %149 : vector<8x16xf32> to vector<1x8x16xf32>
    tpu.vector_store %arg4[%c0_37, %c0_38, %c0_39], %152 {strides = array<i32>} : memref<2x8x16xf32, #tpu.memory_space<vmem>>, vector<1x8x16xf32>,
    %153 = vector.extract_strided_slice %147 {offsets = [0, 16], sizes = [8, 16], strides = [1, 1]} : vector<8x32xf32> to vector<8x16xf32>
    %154 = arith.addf %13, %153 : vector<8x16xf32>
    %c1_40 = arith.constant 1 : index
    %c0_41 = arith.constant 0 : index
    %c0_42 = arith.constant 0 : index
    %155 = vector.load %arg4[%c1_40, %c0_41, %c0_42] : memref<2x8x16xf32, #tpu.memory_space<vmem>>, vector<1x8x16xf32>
    %156 = vector.shape_cast %155 : vector<1x8x16xf32> to vector<8x16xf32>
    %157 = vector.shape_cast %154 : vector<8x16xf32> to vector<1x8x16xf32>
    tpu.vector_store %arg4[%c1_40, %c0_41, %c0_42], %157 {strides = array<i32>} : memref<2x8x16xf32, #tpu.memory_space<vmem>>, vector<1x8x16xf32>,
    return
  }
}

</mosaic_0001>

<llo_original>
// kernel: tpu_custom_call.1
$region0: #{tpu_custom_call.1}
  #allocation0 [shape = 'u32[]', space=smem, size = 0x4, offset = 0x4, fixed_abs, tag = 'smem constant byte address 0x4 - core index']
  #allocation1 [shape = 'u32[144,128]{1,0:T(1,128)}', space=vmem, size = 0x12000, scoped, tag = 'internal scratch']
  %s0 = inlined_call_operand.vmem [shape: f32[2,8,16], index: 0, kind: input, shape index: {}]
  %s1 = inlined_call_operand.vmem [shape: f32[32,16], index: 1, kind: input, shape index: {}]
  %s2 = inlined_call_operand.vmem [shape: bf16[32,8], index: 2, kind: input, shape index: {}]
  %s3 = inlined_call_operand.vmem [shape: bf16[8,32], index: 3, kind: input, shape index: {}]
  %s4 = inlined_call_operand.hbm [shape: f32[2,8,16], index: 4, kind: output, shape index: {}]
  %s5 = sld [smem:[#allocation0]]
  $region26: #{tpu_custom_call.1} parent=0
    _
  %s7 = ssub.s32 1, %s5
  %s8 = scalar_select 0, %s7, %s5
  $region1: #{tpu_custom_call.1} parent=0
    #allocation2 [shape = 'u8[8192]{0}', space=vmem, size = 0x2000, scoped, tag = 'output window, operand 0, single buffered']
    #allocation3 [shape = 's32[1]{0}', space=sflag, size = 0x4, scoped, tag = 'scoped memory for tpu_custom_call.1']
    %9 = vsyncpa [#allocation3], 0
    // Predicated region
    $region2: #{tpu_custom_call.1} parent=1 // pred_check
      _
    $region3: #{tpu_custom_call.1} parent=1 // pred_check_branch
      %11 = sbr.rel (0) target = $region5
    $region4: #{tpu_custom_call.1} parent=1 // pred_region
      _
    $region5: #{tpu_custom_call.1} parent=1 // pred_fallthru
      _
    // Predicated region
    $region6: #{tpu_custom_call.1} parent=1 // pred_check
      _
    $region7: #{tpu_custom_call.1} parent=1 // pred_check_branch
      %13 = sbr.rel (0) target = $region9
    $region8: #{tpu_custom_call.1} parent=1 // pred_region
      _
    $region9: #{tpu_custom_call.1} parent=1 // pred_fallthru
      _
    // Predicated region
    $region10: #{tpu_custom_call.1} parent=1 // pred_check
      _
    $region11: #{tpu_custom_call.1} parent=1 // pred_check_branch
      %15 = sbr.rel (0) target = $region13
    $region12: #{tpu_custom_call.1} parent=1 // pred_region
      _
    $region13: #{tpu_custom_call.1} parent=1 // pred_fallthru
      _
    // Predicated region
    $region14: #{tpu_custom_call.1} parent=1 // pred_check
      _
    $region15: #{tpu_custom_call.1} parent=1 // pred_check_branch
      %17 = sbr.rel (0) target = $region17
    $region16: #{tpu_custom_call.1} parent=1 // pred_region
      _
    $region17: #{tpu_custom_call.1} parent=1 // pred_fallthru
      _
    %v19 = vld [vmem:[%s1] sm:$0xff]
    %v20 = vld [vmem:[%s1 + $0x8] sm:$0xff]
    %v21 = vld [vmem:[%s1 + $0x10] sm:$0xff]
    %v22 = vld [vmem:[%s1 + $0x18] sm:$0xff]
    %v23 = vld [vmem:[%s2] sm:$0xf]
    %v24 = vld [vmem:[%s2 + $0x4] sm:$0xf]
    %v25 = vld [vmem:[%s2 + $0x8] sm:$0xf]
    %v26 = vld [vmem:[%s2 + $0xc] sm:$0xf]
    %v27 = vld [vmem:[%s3] sm:$0xf]
    %v28 = vld [vmem:[%s0] sm:$0xff]
    %s29 = scalar_lea.vmem %s0, 8
    %v30 = vld [vmem:[%s29] sm:$0xff]
    %32 = vrot.lane.b32.xlu0 %v28, 3
    %v33 = vpop.permute.xlu0 %32
    %36 = vrot.lane.b32.xlu0 %v30, 25
    %v37 = vpop.permute.xlu0 %36
    %vm39 = vcmask 23552
    %v40 = vsel %vm39, 0.0, %v33
    %vm41 = vcmask 154624
    %v42 = vsel %vm41, %v40, 0.0
    %vm43 = vcmask 179200
    %v44 = vsel %vm43, %v42, 0.0
    %vm45 = vcmask 203776
    %v46 = vsel %vm45, %v44, %v37
    %vm47 = vcmask 334848
    %v48 = vsel %vm47, %v46, 0.0
    %50 = vset.pattern.permute.xlu0 3
    %51 = vperm.xlu0 %50, %v19
    %v52 = vpop.permute.xlu0 %51
    %54 = vset.pattern.permute.xlu0 4
    %55 = vperm.xlu0 %54, %v19
    %v56 = vpop.permute.xlu0 %55
    %58 = vset.pattern.permute.xlu0 5
    %59 = vperm.xlu0 %58, %v19
    %v60 = vpop.permute.xlu0 %59
    %62 = vset.pattern.permute.xlu0 6
    %63 = vperm.xlu0 %62, %v19
    %v64 = vpop.permute.xlu0 %63
    %66 = vset.pattern.permute.xlu0 7
    %67 = vperm.xlu0 %66, %v19
    %v68 = vpop.permute.xlu0 %67
    %70 = vset.pattern.permute.xlu0 8
    %71 = vperm.xlu0 %70, %v19
    %v72 = vpop.permute.xlu0 %71
    %74 = vset.pattern.permute.xlu0 9
    %75 = vperm.xlu0 %74, %v19
    %v76 = vpop.permute.xlu0 %75
    %78 = vset.pattern.permute.xlu0 10
    %79 = vperm.xlu0 %78, %v19
    %v80 = vpop.permute.xlu0 %79
    %v82 = vmul.f32 %v48, %v52
    %v83 = vadd.f32 %v80, %v82
    %v84 = vmul.f32 %v48, %v56
    %86 = vrot.lane.b32.xlu0 %v84, 127
    %v87 = vpop.permute.xlu0 %86
    %v89 = vadd.f32 %v83, %v87
    %v90 = vmul.f32 %v48, %v60
    %92 = vrot.lane.b32.xlu0 %v90, 126
    %v93 = vpop.permute.xlu0 %92
    %v95 = vadd.f32 %v89, %v93
    %v96 = vmul.f32 %v48, %v64
    %98 = vrot.lane.b32.xlu0 %v96, 125
    %v99 = vpop.permute.xlu0 %98
    %v101 = vadd.f32 %v95, %v99
    %v102 = vmul.f32 %v48, %v68
    %104 = vrot.lane.b32.xlu0 %v102, 124
    %v105 = vpop.permute.xlu0 %104
    %v107 = vadd.f32 %v101, %v105
    %v108 = vmul.f32 %v48, %v72
    %110 = vrot.lane.b32.xlu0 %v108, 123
    %v111 = vpop.permute.xlu0 %110
    %v113 = vadd.f32 %v107, %v111
    %v114 = vmul.f32 %v48, %v76
    %116 = vrot.lane.b32.xlu0 %v114, 122
    %v117 = vpop.permute.xlu0 %116
    %v119 = vadd.f32 %v113, %v117
    %121 = vrot.lane.b32.xlu0 %v119, 122
    %v122 = vpop.permute.xlu0 %121
    %vm124 = vcmask 130048
    %v125 = vsel %vm124, %v119, %v122
    %vm126 = vcmask 261120
    %v127 = vsel %vm126, %v125, 0.0
    %v128 = vrot.slane %v127, 4
    %v129 = vadd.f32 %v127, %v128
    %v130 = vrot.slane %v129, 2
    %v131 = vadd.f32 %v129, %v130
    %v132 = vrot.slane %v131, 1
    %v133 = vadd.f32 %v131, %v132
    %v134 = vrcp.pop 8.0
    %v135 = vmul.f32 %v133, %v134
    %v136 = vsub.f32 %v125, %v135
    %v137 = vmul.f32 %v136, %v136
    %v138 = vsel %vm126, %v137, 0.0
    %v139 = vrot.slane %v138, 4
    %v140 = vadd.f32 %v138, %v139
    %v141 = vrot.slane %v140, 2
    %v142 = vadd.f32 %v140, %v141
    %v143 = vrot.slane %v142, 1
    %v144 = vadd.f32 %v142, %v143
    %v145 = vmul.f32 %v144, %v134
    %v146 = vadd.f32 %v145, 1e-06
    %v147 = vrsqrt.pop %v146
    %v148 = vmul.f32 %v136, %v147
    %149 = vset.pattern.permute.xlu0 11
    %150 = vperm.xlu0 %149, %v19
    %v151 = vpop.permute.xlu0 %150
    %v153 = vmul.f32 %v151, %v148
    %154 = vset.pattern.permute.xlu0 12
    %155 = vperm.xlu0 %154, %v19
    %v156 = vpop.permute.xlu0 %155
    %v158 = vadd.f32 %v153, %v156
    %v159 = vpack.c.bf16 %v158, %v158
    %160 = vset.pattern.permute.xlu0 0
    %161 = vperm.xlu0 %160, %v19
    %v162 = vpop.permute.xlu0 %161
    %165 = vset.pattern.permute.xlu0 0
    %166 = vperm.xlu0 %165, %v20
    %v167 = vpop.permute.xlu0 %166
    %170 = vset.pattern.permute.xlu0 0
    %171 = vperm.xlu0 %170, %v21
    %v172 = vpop.permute.xlu0 %171
    %175 = vset.pattern.permute.xlu0 0
    %176 = vperm.xlu0 %175, %v22
    %v177 = vpop.permute.xlu0 %176
    %v183 = vunpack.c.l.b16 %v23
    %v184 = vunpack.c.l.b16 %v24
    %v185 = vunpack.c.l.b16 %v25
    %v186 = vunpack.c.l.b16 %v26
    %v187 = vpack.c.b16 %v184, %v183
    %v188 = vpack.c.b16 %v186, %v185
    %vm189 = vcmask 64512
    %v191 = vsel %vm189, %v187, 0
    %v194 = vsel %vm189, %v188, 0
    %vm196 = vcmask 1043456
    %v198 = vsel %vm196, %v159, 0
    %200 = vmatprep.subr.bf16.mxu0 0
    %201 = vmatpush1.bf16.msra.mxu0 %v198
    %202 = vmatprep.subr.bf16.mxu0 0
    %203 = vmatpush1.bf16.msra.mxu0 0
    %204 = vmatprep.subr.bf16.mxu0 0
    %205 = vmatpush1.bf16.msra.mxu0 0
    %206 = vmatprep.subr.bf16.mxu0 0
    %207 = vmatpush1.bf16.msra.mxu0 0
    %208 = vmatprep.subr.bf16.mxu0 0
    %209 = vmatpush1.bf16.msra.mxu0 0
    %210 = vmatprep.subr.bf16.mxu0 0
    %211 = vmatpush1.bf16.msra.mxu0 0
    %212 = vmatprep.subr.bf16.mxu0 0
    %213 = vmatpush1.bf16.msra.mxu0 0
    %214 = vmatprep.subr.bf16.mxu0 0
    %215 = vmatpush1.bf16.msra.mxu0 0
    %216 = vmatprep.subr.bf16.mxu0 0
    %217 = vmatpush1.bf16.msra.mxu0 0
    %218 = vmatprep.subr.bf16.mxu0 0
    %219 = vmatpush1.bf16.msra.mxu0 0
    %220 = vmatprep.subr.bf16.mxu0 0
    %221 = vmatpush1.bf16.msra.mxu0 0
    %222 = vmatprep.subr.bf16.mxu0 0
    %223 = vmatpush1.bf16.msra.mxu0 0
    %224 = vmatprep.subr.bf16.mxu0 0
    %225 = vmatpush1.bf16.msra.mxu0 0
    %226 = vmatprep.subr.bf16.mxu0 0
    %227 = vmatpush1.bf16.msra.mxu0 0
    %228 = vmatprep.subr.bf16.mxu0 0
    %229 = vmatpush1.bf16.msra.mxu0 0
    %230 = vmatprep.subr.bf16.mxu0 0
    %231 = vmatpush1.bf16.msra.mxu0 0
    %232 = vmatprep.mubr.bf16.mxu0 0
    %233 = vmatmul.mubr.bf16.gmra.mrb[0].mxu0 %v191
    %v234 = vpop.f32.mrb[0].mxu0
    %v235 = vadd.f32 %v162, %v234
    %v236 = vpop.f32.mrb[0].mxu0
    %v237 = vpop.f32.mrb[0].mxu0
    %v238 = vadd.f32 %v167, %v237
    %v239 = vpop.f32.mrb[0].mxu0
    %240 = vmatprep.mubr.bf16.mxu0 0
    %241 = vmatmul.mubr.bf16.gmra.mrb[0].mxu0 %v194
    %v242 = vpop.f32.mrb[0].mxu0
    %v243 = vadd.f32 %v172, %v242
    %v244 = vpop.f32.mrb[0].mxu0
    %v245 = vpop.f32.mrb[0].mxu0
    %v246 = vadd.f32 %v177, %v245
    %v247 = vpop.f32.mrb[0].mxu0
    %248 = vdwg.mxu0
    %v249 = vmul.f32 %v235, 0.5
    %v250 = vmul.f32 %v238, 0.5
    %v251 = vmul.f32 %v243, 0.5
    %v252 = vmul.f32 %v246, 0.5
    %v253 = vmul.f32 %v235, 0.044715
    %v254 = vmul.f32 %v238, 0.044715
    %v255 = vmul.f32 %v243, 0.044715
    %v256 = vmul.f32 %v246, 0.044715
    %v257 = vmul.f32 %v253, %v235
    %v258 = vmul.f32 %v254, %v238
    %v259 = vmul.f32 %v255, %v243
    %v260 = vmul.f32 %v256, %v246
    %v261 = vmul.f32 %v257, %v235
    %v262 = vmul.f32 %v258, %v238
    %v263 = vmul.f32 %v259, %v243
    %v264 = vmul.f32 %v260, %v246
    %v265 = vadd.f32 %v235, %v261
    %v266 = vadd.f32 %v238, %v262
    %v267 = vadd.f32 %v243, %v263
    %v268 = vadd.f32 %v246, %v264
    %v269 = vmul.f32 %v265, 0.7978846
    %v270 = vmul.f32 %v266, 0.7978846
    %v271 = vmul.f32 %v267, 0.7978846
    %v272 = vmul.f32 %v268, 0.7978846
    %v273 = vtanh.pop %v269
    %v274 = vtanh.pop %v270
    %v275 = vtanh.pop %v271
    %v276 = vtanh.pop %v272
    %v277 = vadd.f32 %v273, 1.0
    %v278 = vadd.f32 %v274, 1.0
    %v279 = vadd.f32 %v275, 1.0
    %v280 = vadd.f32 %v276, 1.0
    %v281 = vmul.f32 %v249, %v277
    %v282 = vmul.f32 %v250, %v278
    %v283 = vmul.f32 %v251, %v279
    %v284 = vmul.f32 %v252, %v280
    %v285 = vmul.f32 %v281, %v281
    %v286 = vmul.f32 %v282, %v282
    %v287 = vmul.f32 %v283, %v283
    %v288 = vmul.f32 %v284, %v284
    %v289 = vsel %vm124, %v285, 0.0
    %290 = vadd.xlane.f32.xlu0 %v289
    %v291 = vpop.xlane.xlu0 %290
    %v292 = vsel %vm124, %v286, 0.0
    %293 = vadd.xlane.f32.xlu0 %v292
    %v294 = vpop.xlane.xlu0 %293
    %v295 = vsel %vm124, %v287, 0.0
    %296 = vadd.xlane.f32.xlu0 %v295
    %v297 = vpop.xlane.xlu0 %296
    %v298 = vsel %vm124, %v288, 0.0
    %299 = vadd.xlane.f32.xlu0 %v298
    %v300 = vpop.xlane.xlu0 %299
    %v301 = vrsqrt.pop %v291
    %v302 = vmul.f32 %v291, %v301
    %vm303 = vcmp.eq.f32.partialorder %v291, inf
    %v304 = vsel %vm303, %v291, %v302
    %vm305 = vcmp.eq.f32.partialorder %v291, 0.0
    %v306 = vand.u32 %v291, 2147483648
    %v307 = vsel %vm305, %v306, %v304
    %v308 = vrsqrt.pop %v294
    %v309 = vmul.f32 %v294, %v308
    %vm310 = vcmp.eq.f32.partialorder %v294, inf
    %v311 = vsel %vm310, %v294, %v309
    %vm312 = vcmp.eq.f32.partialorder %v294, 0.0
    %v313 = vand.u32 %v294, 2147483648
    %v314 = vsel %vm312, %v313, %v311
    %v315 = vrsqrt.pop %v297
    %v316 = vmul.f32 %v297, %v315
    %vm317 = vcmp.eq.f32.partialorder %v297, inf
    %v318 = vsel %vm317, %v297, %v316
    %vm319 = vcmp.eq.f32.partialorder %v297, 0.0
    %v320 = vand.u32 %v297, 2147483648
    %v321 = vsel %vm319, %v320, %v318
    %v322 = vrsqrt.pop %v300
    %v323 = vmul.f32 %v300, %v322
    %vm324 = vcmp.eq.f32.partialorder %v300, inf
    %v325 = vsel %vm324, %v300, %v323
    %vm326 = vcmp.eq.f32.partialorder %v300, 0.0
    %v327 = vand.u32 %v300, 2147483648
    %v328 = vsel %vm326, %v327, %v325
    %333 = vrot.lane.b32.xlu0 %v285, 112
    %v334 = vpop.permute.xlu0 %333
    %335 = vrot.lane.b32.xlu0 %v286, 112
    %v336 = vpop.permute.xlu0 %335
    %337 = vrot.lane.b32.xlu0 %v287, 112
    %v338 = vpop.permute.xlu0 %337
    %339 = vrot.lane.b32.xlu0 %v288, 112
    %v340 = vpop.permute.xlu0 %339
    %v345 = vsel %vm124, %v334, 0.0
    %346 = vadd.xlane.f32.xlu0 %v345
    %v347 = vpop.xlane.xlu0 %346
    %v348 = vsel %vm124, %v336, 0.0
    %349 = vadd.xlane.f32.xlu0 %v348
    %v350 = vpop.xlane.xlu0 %349
    %v351 = vsel %vm124, %v338, 0.0
    %352 = vadd.xlane.f32.xlu0 %v351
    %v353 = vpop.xlane.xlu0 %352
    %v354 = vsel %vm124, %v340, 0.0
    %355 = vadd.xlane.f32.xlu0 %v354
    %v356 = vpop.xlane.xlu0 %355
    %v357 = vrsqrt.pop %v347
    %v358 = vmul.f32 %v347, %v357
    %vm359 = vcmp.eq.f32.partialorder %v347, inf
    %v360 = vsel %vm359, %v347, %v358
    %vm361 = vcmp.eq.f32.partialorder %v347, 0.0
    %v362 = vand.u32 %v347, 2147483648
    %v363 = vsel %vm361, %v362, %v360
    %v364 = vrsqrt.pop %v350
    %v365 = vmul.f32 %v350, %v364
    %vm366 = vcmp.eq.f32.partialorder %v350, inf
    %v367 = vsel %vm366, %v350, %v365
    %vm368 = vcmp.eq.f32.partialorder %v350, 0.0
    %v369 = vand.u32 %v350, 2147483648
    %v370 = vsel %vm368, %v369, %v367
    %v371 = vrsqrt.pop %v353
    %v372 = vmul.f32 %v353, %v371
    %vm373 = vcmp.eq.f32.partialorder %v353, inf
    %v374 = vsel %vm373, %v353, %v372
    %vm375 = vcmp.eq.f32.partialorder %v353, 0.0
    %v376 = vand.u32 %v353, 2147483648
    %v377 = vsel %vm375, %v376, %v374
    %v378 = vrsqrt.pop %v356
    %v379 = vmul.f32 %v356, %v378
    %vm380 = vcmp.eq.f32.partialorder %v356, inf
    %v381 = vsel %vm380, %v356, %v379
    %vm382 = vcmp.eq.f32.partialorder %v356, 0.0
    %v383 = vand.u32 %v356, 2147483648
    %v384 = vsel %vm382, %v383, %v381
    %v385 = vadd.f32 %v307, %v314
    %v386 = vadd.f32 %v385, %v321
    %v387 = vadd.f32 %v386, %v328
    %v388 = vrot.slane %v387, 4
    %v389 = vadd.f32 %v387, %v388
    %v390 = vrot.slane %v389, 2
    %v391 = vadd.f32 %v389, %v390
    %v392 = vrot.slane %v391, 1
    %v393 = vadd.f32 %v391, %v392
    %v394 = vrcp.pop 32.0
    %v395 = vmul.f32 %v393, %v394
    %v396 = vadd.f32 %v395, 1e-06
    %v397 = vrcp.pop %v396
    %v398 = vmul.f32 %v307, %v397
    %v399 = vmul.f32 %v314, %v397
    %v400 = vmul.f32 %v321, %v397
    %v401 = vmul.f32 %v328, %v397
    %v402 = vadd.f32 %v363, %v370
    %v403 = vadd.f32 %v402, %v377
    %v404 = vadd.f32 %v403, %v384
    %v405 = vrot.slane %v404, 4
    %v406 = vadd.f32 %v404, %v405
    %v407 = vrot.slane %v406, 2
    %v408 = vadd.f32 %v406, %v407
    %v409 = vrot.slane %v408, 1
    %v410 = vadd.f32 %v408, %v409
    %v411 = vmul.f32 %v410, %v394
    %v412 = vadd.f32 %v411, 1e-06
    %v413 = vrcp.pop %v412
    %v414 = vmul.f32 %v363, %v413
    %v415 = vmul.f32 %v370, %v413
    %v416 = vmul.f32 %v377, %v413
    %v417 = vmul.f32 %v384, %v413
    %v418 = vlaneseq
    %v419 = vand.u32 %v418, 127
    %vm420 = vcmp.lt.s32.totalorder %v419, 16
    %v421 = vsel %vm420, %v398, %v414
    %v422 = vsel %vm420, %v399, %v415
    %v423 = vsel %vm420, %v400, %v416
    %v424 = vsel %vm420, %v401, %v417
    %v425 = vmul.f32 %v281, %v421
    %v426 = vmul.f32 %v282, %v422
    %v427 = vmul.f32 %v283, %v423
    %v428 = vmul.f32 %v284, %v424
    %429 = vset.pattern.permute.xlu0 1
    %430 = vperm.xlu0 %429, %v19
    %v431 = vpop.permute.xlu0 %430
    %433 = vset.pattern.permute.xlu0 1
    %434 = vperm.xlu0 %433, %v20
    %v435 = vpop.permute.xlu0 %434
    %437 = vset.pattern.permute.xlu0 1
    %438 = vperm.xlu0 %437, %v21
    %v439 = vpop.permute.xlu0 %438
    %441 = vset.pattern.permute.xlu0 1
    %442 = vperm.xlu0 %441, %v22
    %v443 = vpop.permute.xlu0 %442
    %v445 = vmul.f32 %v431, %v425
    %v446 = vmul.f32 %v435, %v426
    %v447 = vmul.f32 %v439, %v427
    %v448 = vmul.f32 %v443, %v428
    %449 = vset.pattern.permute.xlu0 2
    %450 = vperm.xlu0 %449, %v19
    %v451 = vpop.permute.xlu0 %450
    %453 = vset.pattern.permute.xlu0 2
    %454 = vperm.xlu0 %453, %v20
    %v455 = vpop.permute.xlu0 %454
    %457 = vset.pattern.permute.xlu0 2
    %458 = vperm.xlu0 %457, %v21
    %v459 = vpop.permute.xlu0 %458
    %461 = vset.pattern.permute.xlu0 2
    %462 = vperm.xlu0 %461, %v22
    %v463 = vpop.permute.xlu0 %462
    %v465 = vadd.f32 %v445, %v451
    %v466 = vadd.f32 %v446, %v455
    %v467 = vadd.f32 %v447, %v459
    %v468 = vadd.f32 %v448, %v463
    %v469 = vadd.f32 %v465, %v281
    %v470 = vadd.f32 %v466, %v282
    %v471 = vadd.f32 %v467, %v283
    %v472 = vadd.f32 %v468, %v284
    %v473 = vpack.c.bf16 %v470, %v469
    %v474 = vpack.c.bf16 %v472, %v471
    %475 = vset.pattern.permute.xlu0 13
    %476 = vperm.xlu0 %475, %v19
    %v477 = vpop.permute.xlu0 %476
    %v480 = vsel %vm126, %v27, 0
    %482 = vmatprep.subr.bf16.mxu0 0
    %483 = vmatpush1.bf16.msra.mxu0 %v473
    %484 = vmatprep.subr.bf16.mxu0 0
    %485 = vmatpush1.bf16.msra.mxu0 %v474
    %486 = vmatprep.subr.bf16.mxu0 0
    %487 = vmatpush1.bf16.msra.mxu0 0
    %488 = vmatprep.subr.bf16.mxu0 0
    %489 = vmatpush1.bf16.msra.mxu0 0
    %490 = vmatprep.subr.bf16.mxu0 0
    %491 = vmatpush1.bf16.msra.mxu0 0
    %492 = vmatprep.subr.bf16.mxu0 0
    %493 = vmatpush1.bf16.msra.mxu0 0
    %494 = vmatprep.subr.bf16.mxu0 0
    %495 = vmatpush1.bf16.msra.mxu0 0
    %496 = vmatprep.subr.bf16.mxu0 0
    %497 = vmatpush1.bf16.msra.mxu0 0
    %498 = vmatprep.subr.bf16.mxu0 0
    %499 = vmatpush1.bf16.msra.mxu0 0
    %500 = vmatprep.subr.bf16.mxu0 0
    %501 = vmatpush1.bf16.msra.mxu0 0
    %502 = vmatprep.subr.bf16.mxu0 0
    %503 = vmatpush1.bf16.msra.mxu0 0
    %504 = vmatprep.subr.bf16.mxu0 0
    %505 = vmatpush1.bf16.msra.mxu0 0
    %506 = vmatprep.subr.bf16.mxu0 0
    %507 = vmatpush1.bf16.msra.mxu0 0
    %508 = vmatprep.subr.bf16.mxu0 0
    %509 = vmatpush1.bf16.msra.mxu0 0
    %510 = vmatprep.subr.bf16.mxu0 0
    %511 = vmatpush1.bf16.msra.mxu0 0
    %512 = vmatprep.subr.bf16.mxu0 0
    %513 = vmatpush1.bf16.msra.mxu0 0
    %514 = vmatprep.mubr.bf16.mxu0 0
    %515 = vmatmul.mubr.bf16.gmra.mrb[0].mxu0 %v480
    %v516 = vpop.f32.mrb[0].mxu0
    %v517 = vadd.f32 %v477, %v516
    %v518 = vpop.f32.mrb[0].mxu0
    %v519 = vpop.f32.mrb[0].mxu0
    %v520 = vpop.f32.mrb[0].mxu0
    %521 = vdwg.mxu0
    %v522 = vadd.f32 %v28, %v517
    %523 = vst.msk [vmem:[#allocation2] sm:$0xff] %vm124, %v522
    %525 = vrot.lane.b32.xlu0 %v517, 112
    %v526 = vpop.permute.xlu0 %525
    %v528 = vadd.f32 %v30, %v526
    %s529 = scalar_lea.vmem [#allocation2], 8
    %530 = vst.msk [vmem:[%s529] sm:$0xff] %vm124, %v528
    // Predicated region
    $region18: #{tpu_custom_call.1} parent=1 // pred_check
      _
    $region19: #{tpu_custom_call.1} parent=1 // pred_check_branch
      %532 = sbr.rel (0) target = $region21
    $region20: #{tpu_custom_call.1} parent=1 // pred_region
      %s534 = ssub.s32 256, 256
      %535 = vsyncadd [#allocation3], %s534
      %s536 = sshll.u32 [#allocation2], 4
      %s537 = int_to_ptr.vmem [resolvable:$true] %s536
      %542 = dma.vmem_to_hbm [thread:$0]  %s537, 256, %s4, [#allocation3], 128, 128, 8
    $region21: #{tpu_custom_call.1} parent=1 // pred_fallthru
      _
    // Predicated region
    $region22: #{tpu_custom_call.1} parent=1 // pred_check
      _
    $region23: #{tpu_custom_call.1} parent=1 // pred_check_branch
      %544 = sbr.rel (0) target = $region25
    $region24: #{tpu_custom_call.1} parent=1 // pred_region
      %545 = dma.done [#allocation3], 256
    $region25: #{tpu_custom_call.1} parent=1 // pred_fallthru
      _
    %546 = vsyncpa [#allocation3], 1

</llo_original>
